<compile_context>
chip_gen: v7x
topology: tpu7x:2x2x1
jax: 0.10.0
libtpu: 0.0.40
codegen_flags: <defaults>
</compile_context>

<pallas_src>
import functools

import numpy as np
import jax
import jax.numpy as jnp
from jax import lax
from jax.experimental import pallas as pl
from jax.experimental.pallas import tpu as pltpu


# -----------------------------------------------------------------------------
# Hyperparameters (small, consistent with QNet.__init__)
# -----------------------------------------------------------------------------
LATENT_DIM = 32        # hyperparams['latent_dim']
HIDDEN = 32            # hyperparams['hidden']
MAX_LV = 3             # hyperparams['max_lv']
NUM_NODE_FEATS = 3     # QNet.num_node_feats
NUM_STEPS = 3          # NStepQNet(num_steps)
BN_EPS = 1e-5
OUT_LANES = 128        # lane-dense output slab width (real q-value in col 0)

# Parameter-slab row offsets (each sub-array's row start aligned to 8 sublanes)
ROW_W_N2L = 0                       # [NUM_NODE_FEATS, D]    cols 0:D
ROW_BIAS2 = 8                       # row 8 = b_n2l, row 9 = conv_b, cols 0:D
ROW_CONV_W = 16                     # [D, D]                 cols 0:D
ROW_W1 = 48                         # [2D, H]                cols 0:H
ROW_BGB = 112                       # rows: b1, gamma, beta  cols 0:H
ROW_WOUTB = 120                     # [H, OUT_LANES] wout_pad; row +H = bout_pad
SLAB_ROWS = 160                     # 153 used, padded to a multiple of 8


# -----------------------------------------------------------------------------
# Fused kernel: structure2vec embedding + pooling + QNet head
#   actions_mode == False : per-node q-values  (aux = pool^T, precomputed host-side)
#   actions_mode == True  : per-graph q-values (aux = one-hot row-selection matrix)
# -----------------------------------------------------------------------------
def fused_qnet_kernel(actions_mode, nf_ref, adj_ref, pool_ref, aux_ref,
                      slab_ref, out_ref):
    d, h = LATENT_DIM, HIDDEN

    # ---- unpack the single parameter slab with static slices (free) ---------
    w_n2l = slab_ref[ROW_W_N2L:ROW_W_N2L + NUM_NODE_FEATS, 0:d]      # [3, D]
    b_n2l = slab_ref[ROW_BIAS2:ROW_BIAS2 + 1, 0:d]                   # [1, D]
    conv_b = slab_ref[ROW_BIAS2 + 1:ROW_BIAS2 + 2, 0:d]              # [1, D]
    conv_w = slab_ref[ROW_CONV_W:ROW_CONV_W + d, 0:d]                # [D, D]
    w1_embed = slab_ref[ROW_W1:ROW_W1 + d, 0:h]                      # [D, H]
    w1_rep = slab_ref[ROW_W1 + d:ROW_W1 + 2 * d, 0:h]                # [D, H]
    b1 = slab_ref[ROW_BGB:ROW_BGB + 1, 0:h]                          # [1, H]
    gamma = slab_ref[ROW_BGB + 1:ROW_BGB + 2, 0:h]                   # [1, H]
    beta = slab_ref[ROW_BGB + 2:ROW_BGB + 3, 0:h]                    # [1, H]
    wout = slab_ref[ROW_WOUTB:ROW_WOUTB + h, :]                      # [H, 128]
    bout = slab_ref[ROW_WOUTB + h:ROW_WOUTB + h + 1, :]              # [1, 128]

    # ---- input message: node_feat @ W_n2l + b --------------------------------
    input_msg = (jnp.dot(nf_ref[...], w_n2l,
                         preferred_element_type=jnp.float32) + b_n2l)  # [N, D]
    cur = jnp.maximum(input_msg, 0.0)

    # hoisted out of the MAX_LV loop: skip connection + conv bias (one add)
    skip = input_msg + conv_b                                          # [N, D]

    adj = adj_ref[...]                                                 # [N, N] f32
    for _ in range(MAX_LV):                       # static, small trip count
        n2npool = jnp.dot(adj, cur, preferred_element_type=jnp.float32)
        node_linear = jnp.dot(n2npool, conv_w,
                              preferred_element_type=jnp.float32)
        cur = jnp.maximum(node_linear + skip, 0.0)                     # [N, D]

    # ---- graph sum-pooling ----------------------------------------------------
    pool = pool_ref[...]                                               # [B, N]
    graph_embed = jnp.dot(pool, cur,
                          preferred_element_type=jnp.float32)          # [B, D]

    if actions_mode:
        # embed[shifted, :] as a one-hot row-selection matmul; rep = graph_embed
        embed_sel = jnp.dot(aux_ref[...], cur,
                            preferred_element_type=jnp.float32)        # [B, D]
        rep = graph_embed
    else:
        # rep_global_embed: replicate each graph embedding to its nodes via
        # the host-precomputed pool^T (no in-kernel transpose).
        embed_sel = cur                                                # [N, D]
        rep = jnp.dot(aux_ref[...], graph_embed,
                      preferred_element_type=jnp.float32)              # [N, D]

    # ---- head: linear_1 (split, no concat) -> BatchNorm1d (train) -> ReLU ---
    hpre = (jnp.dot(embed_sel, w1_embed, preferred_element_type=jnp.float32)
            + jnp.dot(rep, w1_rep, preferred_element_type=jnp.float32)
            + b1)                                                      # [M, H]

    inv_m = 1.0 / hpre.shape[0]
    mean = jnp.sum(hpre, axis=0, keepdims=True) * inv_m
    ex2 = jnp.sum(hpre * hpre, axis=0, keepdims=True) * inv_m
    var = jnp.maximum(ex2 - mean * mean, 0.0)     # biased batch variance, clamped
    scale = lax.rsqrt(var + BN_EPS) * gamma
    h_act = jnp.maximum((hpre - mean) * scale + beta, 0.0)

    # ---- linear_out as a lane-dense store (wout padded to 128 lanes) --------
    out_ref[...] = (jnp.dot(h_act, wout, preferred_element_type=jnp.float32)
                    + bout)


@functools.partial(jax.jit, static_argnames=("actions_mode",))
def run_fused(node_feat, adj, pool, aux, param_slab, *, actions_mode):
    m = aux.shape[0] if actions_mode else node_feat.shape[0]
    operands = [node_feat, adj, pool, aux, param_slab]

    kernel = functools.partial(fused_qnet_kernel, actions_mode)
    out = pl.pallas_call(
        kernel,
        out_shape=jax.ShapeDtypeStruct((m, OUT_LANES), jnp.float32),
        in_specs=[pl.BlockSpec(memory_space=pltpu.MemorySpace.VMEM)
                  for _ in operands],
        out_specs=pl.BlockSpec(memory_space=pltpu.MemorySpace.VMEM),
        compiler_params=pltpu.CompilerParams(
            vmem_limit_bytes=32 * 1024 * 1024),
    )(*operands)
    # q-values are lane-dense in the kernel; the real value lives in column 0.
    return out[:, 0:1]                                                # [M, 1]


# -----------------------------------------------------------------------------
# Parameter initialization (deterministic, synthetic), packed into one slab
# per time-step head.  The s2v parameters are shared across steps (as in
# NStepQNet) and simply duplicated into each per-step slab (tiny).
# -----------------------------------------------------------------------------
def init_params(key):
    d, h = LATENT_DIM, HIDDEN
    keys = jax.random.split(key, 4 + NUM_STEPS)
    w_n2l = 0.1 * np.asarray(jax.random.normal(keys[0], (NUM_NODE_FEATS, d)),
                             np.float32)
    b_n2l = 0.1 * np.asarray(jax.random.normal(keys[1], (1, d)), np.float32)
    conv_w = 0.1 * np.asarray(jax.random.normal(keys[2], (d, d)), np.float32)
    conv_b = 0.1 * np.asarray(jax.random.normal(keys[3], (1, d)), np.float32)

    slabs = []
    for t in range(NUM_STEPS):
        k0, k1, k2 = jax.random.split(keys[4 + t], 3)
        # linear_1: (2*d -> h), rows 0:d act on embed, d:2d act on graph_embed
        w1 = 0.1 * np.asarray(jax.random.normal(k0, (2 * d, h)), np.float32)
        b1 = 0.1 * np.asarray(jax.random.normal(k1, (1, h)), np.float32)
        gamma = np.ones((1, h), np.float32)
        beta = np.zeros((1, h), np.float32)
        # linear_out: (h -> 1), padded to OUT_LANES lanes; bias as the next row
        wout = 0.1 * np.asarray(jax.random.normal(k2, (h, 1)), np.float32)
        bout = np.zeros((1, 1), np.float32)

        slab = np.zeros((SLAB_ROWS, OUT_LANES), np.float32)
        slab[ROW_W_N2L:ROW_W_N2L + NUM_NODE_FEATS, 0:d] = w_n2l
        slab[ROW_BIAS2:ROW_BIAS2 + 1, 0:d] = b_n2l
        slab[ROW_BIAS2 + 1:ROW_BIAS2 + 2, 0:d] = conv_b
        slab[ROW_CONV_W:ROW_CONV_W + d, 0:d] = conv_w
        slab[ROW_W1:ROW_W1 + 2 * d, 0:h] = w1
        slab[ROW_BGB:ROW_BGB + 1, 0:h] = b1
        slab[ROW_BGB + 1:ROW_BGB + 2, 0:h] = gamma
        slab[ROW_BGB + 2:ROW_BGB + 3, 0:h] = beta
        slab[ROW_WOUTB:ROW_WOUTB + h, 0:1] = wout
        slab[ROW_WOUTB + h:ROW_WOUTB + h + 1, 0:1] = bout
        slabs.append(jnp.asarray(slab))
    return slabs


# -----------------------------------------------------------------------------
# Host-side glue: node features, pooling / adjacency, greedy action selection
# -----------------------------------------------------------------------------
def prepare_node_features(nodes_per_graph, picked_first, picked_second):
    n_total = int(np.sum(nodes_per_graph))
    prefix_sum = np.cumsum(nodes_per_graph).astype(np.int64)
    node_feat = np.zeros((n_total, NUM_NODE_FEATS), np.float32)
    node_feat[:, 0] = 1.0
    offsets = np.concatenate([[0], prefix_sum[:-1]])
    for i, p in enumerate(picked_first):
        if p is not None:
            node_feat[offsets[i] + p] = [0.0, 1.0, 0.0]
    for i, p in enumerate(picked_second):
        if p is not None:
            node_feat[offsets[i] + p] = [0.0, 0.0, 1.0]
    return jnp.asarray(node_feat), prefix_sum


def make_pool(nodes_per_graph):
    n_total = int(np.sum(nodes_per_graph))
    pool = np.zeros((len(nodes_per_graph), n_total), np.float32)
    off = 0
    for i, n in enumerate(nodes_per_graph):
        pool[i, off:off + n] = 1.0
        off += n
    # pool [B, N] and its transpose [N, B] are both built host-side (free),
    # avoiding an in-kernel XLU transpose in the per-node path.
    return jnp.asarray(pool), jnp.asarray(pool.T.copy())


def make_ring_adj(nodes_per_graph):
    n_total = int(np.sum(nodes_per_graph))
    adj = np.zeros((n_total, n_total), np.float32)
    off = 0
    for n in nodes_per_graph:
        for j in range(n):
            a, b = off + j, off + (j + 1) % n
            adj[a, b] = 1.0
            adj[b, a] = 1.0
        off += n
    return jnp.asarray(adj)


def greedy_actions_from_pred(raw_pred, prefix_sum, banned_list=None):
    """Mirrors greedy_actions + jmax from the reference (host-side numpy)."""
    q = np.asarray(raw_pred).reshape(-1).astype(np.float32).copy()
    ps = np.asarray(prefix_sum)
    if banned_list is not None:
        offset = 0
        for i in range(len(ps)):
            if banned_list[i] is not None:
                for j in banned_list[i]:
                    q[offset + j] = np.finfo(np.float32).min
            offset = int(ps[i])
    actions, values = [], []
    start = 0
    for i in range(len(ps)):
        end = int(ps[i])
        seg = q[start:end]
        a = int(np.argmax(seg))
        actions.append(a)
        values.append(float(seg[a]))
        start = end
    return (jnp.asarray(actions, dtype=jnp.int32),
            jnp.asarray(values, dtype=jnp.float32))


# -----------------------------------------------------------------------------
# NStepQNet forward
# -----------------------------------------------------------------------------
def nstep_qnet_forward(time_t, node_feat, adj, pool, pool_t, prefix_sum,
                       param_slabs, actions=None, greedy_acts=False,
                       banned_list=None):
    assert 0 <= time_t < NUM_STEPS
    param_slab = param_slabs[time_t]

    if actions is None:
        raw_pred = run_fused(node_feat, adj, pool, pool_t, param_slab,
                             actions_mode=False)
    else:
        # add_offset + one-hot row-selection matrix (host glue, like reference)
        ps = np.asarray(prefix_sum)
        offsets = np.concatenate([[0], ps[:-1]])
        shifted = np.asarray(actions) + offsets
        sel = np.zeros((len(ps), adj.shape[0]), np.float32)
        sel[np.arange(len(ps)), shifted] = 1.0
        raw_pred = run_fused(node_feat, adj, pool, jnp.asarray(sel), param_slab,
                             actions_mode=True)

    out_actions = actions
    if greedy_acts:
        out_actions, _ = greedy_actions_from_pred(raw_pred, prefix_sum,
                                                  banned_list)
    return out_actions, raw_pred, prefix_sum


# -----------------------------------------------------------------------------
# Main
# -----------------------------------------------------------------------------
if __name__ == "__main__":
    key = jax.random.PRNGKey(0)
    param_slabs = init_params(key)

    # Batch of 2 graphs, 8 nodes each (N = 16 total nodes).
    nodes_per_graph = [8, 8]
    picked_first = [0, 2]
    picked_second = [3, 5]

    node_feat, prefix_sum = prepare_node_features(
        nodes_per_graph, picked_first, picked_second)
    adj = make_ring_adj(nodes_per_graph)
    pool, pool_t = make_pool(nodes_per_graph)

    # Path 1: actions=None, greedy action selection (one q-value per node),
    # with banned_list masking on the second graph.
    actions, raw_pred, _ = nstep_qnet_forward(
        time_t=1, node_feat=node_feat, adj=adj, pool=pool, pool_t=pool_t,
        prefix_sum=prefix_sum, param_slabs=param_slabs,
        actions=None, greedy_acts=True, banned_list=[None, [0]])
    jax.block_until_ready(raw_pred)
    jax.block_until_ready(actions)
    assert raw_pred.shape == (sum(nodes_per_graph), 1)
    assert actions.shape == (len(nodes_per_graph),)
    assert bool(jnp.all(jnp.isfinite(raw_pred)))

    # Path 2: provided actions (one q-value per graph).
    given_actions = np.array([1, 4], dtype=np.int64)
    _, raw_pred2, _ = nstep_qnet_forward(
        time_t=2, node_feat=node_feat, adj=adj, pool=pool, pool_t=pool_t,
        prefix_sum=prefix_sum, param_slabs=param_slabs,
        actions=given_actions, greedy_acts=False)
    jax.block_until_ready(raw_pred2)
    assert raw_pred2.shape == (len(nodes_per_graph), 1)
    assert bool(jnp.all(jnp.isfinite(raw_pred2)))

    print("KERNEL_OK")
</pallas_src>

<mosaic_0001>
module attributes {stable_mosaic.version = 11 : i64} {
  func.func @fused_qnet_kernel(%arg0: memref<16x3xf32, #tpu.memory_space<vmem>>, %arg1: memref<16x16xf32, #tpu.memory_space<vmem>>, %arg2: memref<2x16xf32, #tpu.memory_space<vmem>>, %arg3: memref<16x2xf32, #tpu.memory_space<vmem>>, %arg4: memref<160x128xf32, #tpu.memory_space<vmem>>, %arg5: memref<16x128xf32, #tpu.memory_space<vmem>>) attributes {dimension_semantics = [], scalar_prefetch = 0 : i64, scratch_operands = 0 : i64, tpu.core_type = #tpu.core_type<tc>} {
    %c0 = arith.constant 0 : index
    %c0_0 = arith.constant 0 : index
    %0 = vector.load %arg4[%c0, %c0_0] : memref<160x128xf32, #tpu.memory_space<vmem>>, vector<3x32xf32>
    %c8 = arith.constant 8 : index
    %c0_1 = arith.constant 0 : index
    %1 = vector.load %arg4[%c8, %c0_1] : memref<160x128xf32, #tpu.memory_space<vmem>>, vector<1x32xf32>
    %c9 = arith.constant 9 : index
    %c0_2 = arith.constant 0 : index
    %2 = vector.load %arg4[%c9, %c0_2] : memref<160x128xf32, #tpu.memory_space<vmem>>, vector<1x32xf32>
    %c16 = arith.constant 16 : index
    %c0_3 = arith.constant 0 : index
    %3 = vector.load %arg4[%c16, %c0_3] : memref<160x128xf32, #tpu.memory_space<vmem>>, vector<32x32xf32>
    %c48 = arith.constant 48 : index
    %c0_4 = arith.constant 0 : index
    %4 = vector.load %arg4[%c48, %c0_4] : memref<160x128xf32, #tpu.memory_space<vmem>>, vector<32x32xf32>
    %c80 = arith.constant 80 : index
    %c0_5 = arith.constant 0 : index
    %5 = vector.load %arg4[%c80, %c0_5] : memref<160x128xf32, #tpu.memory_space<vmem>>, vector<32x32xf32>
    %c112 = arith.constant 112 : index
    %c0_6 = arith.constant 0 : index
    %6 = vector.load %arg4[%c112, %c0_6] : memref<160x128xf32, #tpu.memory_space<vmem>>, vector<1x32xf32>
    %c113 = arith.constant 113 : index
    %c0_7 = arith.constant 0 : index
    %7 = vector.load %arg4[%c113, %c0_7] : memref<160x128xf32, #tpu.memory_space<vmem>>, vector<1x32xf32>
    %c114 = arith.constant 114 : index
    %c0_8 = arith.constant 0 : index
    %8 = vector.load %arg4[%c114, %c0_8] : memref<160x128xf32, #tpu.memory_space<vmem>>, vector<1x32xf32>
    %c120 = arith.constant 120 : index
    %c0_9 = arith.constant 0 : index
    %9 = vector.load %arg4[%c120, %c0_9] : memref<160x128xf32, #tpu.memory_space<vmem>>, vector<32x128xf32>
    %c152 = arith.constant 152 : index
    %c0_10 = arith.constant 0 : index
    %10 = vector.load %arg4[%c152, %c0_10] : memref<160x128xf32, #tpu.memory_space<vmem>>, vector<1x128xf32>
    %c0_11 = arith.constant 0 : index
    %c0_12 = arith.constant 0 : index
    %11 = vector.load %arg0[%c0_11, %c0_12] : memref<16x3xf32, #tpu.memory_space<vmem>>, vector<16x3xf32>
    %cst = arith.constant dense<0.000000e+00> : vector<16x32xf32>
    %12 = tpu.matmul %11, %0, %cst {dimension_numbers = #tpu.dot_dimension_numbers<[1], [0], [0], [1], [0, 0, 1, 1], [], []>} : vector<16x3xf32>, vector<3x32xf32>, vector<16x32xf32> -> vector<16x32xf32>
    %13 = vector.broadcast %1 : vector<1x32xf32> to vector<16x32xf32>
    %14 = arith.addf %12, %13 : vector<16x32xf32>
    %cst_13 = arith.constant 0.000000e+00 : f32
    %15 = vector.broadcast %cst_13 : f32 to vector<16x32xf32>
    %16 = arith.maximumf %14, %15 : vector<16x32xf32>
    %17 = vector.broadcast %2 : vector<1x32xf32> to vector<16x32xf32>
    %18 = arith.addf %14, %17 : vector<16x32xf32>
    %c0_14 = arith.constant 0 : index
    %c0_15 = arith.constant 0 : index
    %19 = vector.load %arg1[%c0_14, %c0_15] : memref<16x16xf32, #tpu.memory_space<vmem>>, vector<16x16xf32>
    %cst_16 = arith.constant dense<0.000000e+00> : vector<16x32xf32>
    %20 = tpu.matmul %19, %16, %cst_16 {dimension_numbers = #tpu.dot_dimension_numbers<[1], [0], [0], [1], [0, 0, 1, 1], [], []>} : vector<16x16xf32>, vector<16x32xf32>, vector<16x32xf32> -> vector<16x32xf32>
    %cst_17 = arith.constant dense<0.000000e+00> : vector<16x32xf32>
    %21 = tpu.matmul %20, %3, %cst_17 {dimension_numbers = #tpu.dot_dimension_numbers<[1], [0], [0], [1], [0, 0, 1, 1], [], []>} : vector<16x32xf32>, vector<32x32xf32>, vector<16x32xf32> -> vector<16x32xf32>
    %22 = arith.addf %21, %18 : vector<16x32xf32>
    %cst_18 = arith.constant 0.000000e+00 : f32
    %23 = vector.broadcast %cst_18 : f32 to vector<16x32xf32>
    %24 = arith.maximumf %22, %23 : vector<16x32xf32>
    %cst_19 = arith.constant dense<0.000000e+00> : vector<16x32xf32>
    %25 = tpu.matmul %19, %24, %cst_19 {dimension_numbers = #tpu.dot_dimension_numbers<[1], [0], [0], [1], [0, 0, 1, 1], [], []>} : vector<16x16xf32>, vector<16x32xf32>, vector<16x32xf32> -> vector<16x32xf32>
    %cst_20 = arith.constant dense<0.000000e+00> : vector<16x32xf32>
    %26 = tpu.matmul %25, %3, %cst_20 {dimension_numbers = #tpu.dot_dimension_numbers<[1], [0], [0], [1], [0, 0, 1, 1], [], []>} : vector<16x32xf32>, vector<32x32xf32>, vector<16x32xf32> -> vector<16x32xf32>
    %27 = arith.addf %26, %18 : vector<16x32xf32>
    %cst_21 = arith.constant 0.000000e+00 : f32
    %28 = vector.broadcast %cst_21 : f32 to vector<16x32xf32>
    %29 = arith.maximumf %27, %28 : vector<16x32xf32>
    %cst_22 = arith.constant dense<0.000000e+00> : vector<16x32xf32>
    %30 = tpu.matmul %19, %29, %cst_22 {dimension_numbers = #tpu.dot_dimension_numbers<[1], [0], [0], [1], [0, 0, 1, 1], [], []>} : vector<16x16xf32>, vector<16x32xf32>, vector<16x32xf32> -> vector<16x32xf32>
    %cst_23 = arith.constant dense<0.000000e+00> : vector<16x32xf32>
    %31 = tpu.matmul %30, %3, %cst_23 {dimension_numbers = #tpu.dot_dimension_numbers<[1], [0], [0], [1], [0, 0, 1, 1], [], []>} : vector<16x32xf32>, vector<32x32xf32>, vector<16x32xf32> -> vector<16x32xf32>
    %32 = arith.addf %31, %18 : vector<16x32xf32>
    %cst_24 = arith.constant 0.000000e+00 : f32
    %33 = vector.broadcast %cst_24 : f32 to vector<16x32xf32>
    %34 = arith.maximumf %32, %33 : vector<16x32xf32>
    %c0_25 = arith.constant 0 : index
    %c0_26 = arith.constant 0 : index
    %35 = vector.load %arg2[%c0_25, %c0_26] : memref<2x16xf32, #tpu.memory_space<vmem>>, vector<2x16xf32>
    %cst_27 = arith.constant dense<0.000000e+00> : vector<2x32xf32>
    %36 = tpu.matmul %35, %34, %cst_27 {dimension_numbers = #tpu.dot_dimension_numbers<[1], [0], [0], [1], [0, 0, 1, 1], [], []>} : vector<2x16xf32>, vector<16x32xf32>, vector<2x32xf32> -> vector<2x32xf32>
    %c0_28 = arith.constant 0 : index
    %c0_29 = arith.constant 0 : index
    %37 = vector.load %arg3[%c0_28, %c0_29] : memref<16x2xf32, #tpu.memory_space<vmem>>, vector<16x2xf32>
    %cst_30 = arith.constant dense<0.000000e+00> : vector<16x32xf32>
    %38 = tpu.matmul %37, %36, %cst_30 {dimension_numbers = #tpu.dot_dimension_numbers<[1], [0], [0], [1], [0, 0, 1, 1], [], []>} : vector<16x2xf32>, vector<2x32xf32>, vector<16x32xf32> -> vector<16x32xf32>
    %cst_31 = arith.constant dense<0.000000e+00> : vector<16x32xf32>
    %39 = tpu.matmul %34, %4, %cst_31 {dimension_numbers = #tpu.dot_dimension_numbers<[1], [0], [0], [1], [0, 0, 1, 1], [], []>} : vector<16x32xf32>, vector<32x32xf32>, vector<16x32xf32> -> vector<16x32xf32>
    %cst_32 = arith.constant dense<0.000000e+00> : vector<16x32xf32>
    %40 = tpu.matmul %38, %5, %cst_32 {dimension_numbers = #tpu.dot_dimension_numbers<[1], [0], [0], [1], [0, 0, 1, 1], [], []>} : vector<16x32xf32>, vector<32x32xf32>, vector<16x32xf32> -> vector<16x32xf32>
    %41 = arith.addf %39, %40 : vector<16x32xf32>
    %42 = vector.broadcast %6 : vector<1x32xf32> to vector<16x32xf32>
    %43 = arith.addf %41, %42 : vector<16x32xf32>
    %cst_33 = arith.constant dense<0.000000e+00> : vector<32xf32>
    %44 = vector.multi_reduction <add>, %43, %cst_33 [0] : vector<16x32xf32> to vector<32xf32>
    %45 = vector.shape_cast %44 : vector<32xf32> to vector<1x32xf32>
    %cst_34 = arith.constant 6.250000e-02 : f32
    %46 = vector.broadcast %cst_34 : f32 to vector<1x32xf32>
    %47 = arith.mulf %45, %46 : vector<1x32xf32>
    %48 = arith.mulf %43, %43 : vector<16x32xf32>
    %cst_35 = arith.constant dense<0.000000e+00> : vector<32xf32>
    %49 = vector.multi_reduction <add>, %48, %cst_35 [0] : vector<16x32xf32> to vector<32xf32>
    %50 = vector.shape_cast %49 : vector<32xf32> to vector<1x32xf32>
    %cst_36 = arith.constant 6.250000e-02 : f32
    %51 = vector.broadcast %cst_36 : f32 to vector<1x32xf32>
    %52 = arith.mulf %50, %51 : vector<1x32xf32>
    %53 = arith.mulf %47, %47 : vector<1x32xf32>
    %54 = arith.subf %52, %53 : vector<1x32xf32>
    %cst_37 = arith.constant 0.000000e+00 : f32
    %55 = vector.broadcast %cst_37 : f32 to vector<1x32xf32>
    %56 = arith.maximumf %54, %55 : vector<1x32xf32>
    %cst_38 = arith.constant 9.99999974E-6 : f32
    %57 = vector.broadcast %cst_38 : f32 to vector<1x32xf32>
    %58 = arith.addf %56, %57 : vector<1x32xf32>
    %59 = math.rsqrt %58 : vector<1x32xf32>
    %60 = arith.mulf %59, %7 : vector<1x32xf32>
    %61 = vector.broadcast %47 : vector<1x32xf32> to vector<16x32xf32>
    %62 = arith.subf %43, %61 : vector<16x32xf32>
    %63 = vector.broadcast %60 : vector<1x32xf32> to vector<16x32xf32>
    %64 = arith.mulf %62, %63 : vector<16x32xf32>
    %65 = vector.broadcast %8 : vector<1x32xf32> to vector<16x32xf32>
    %66 = arith.addf %64, %65 : vector<16x32xf32>
    %cst_39 = arith.constant 0.000000e+00 : f32
    %67 = vector.broadcast %cst_39 : f32 to vector<16x32xf32>
    %68 = arith.maximumf %66, %67 : vector<16x32xf32>
    %cst_40 = arith.constant dense<0.000000e+00> : vector<16x128xf32>
    %69 = tpu.matmul %68, %9, %cst_40 {dimension_numbers = #tpu.dot_dimension_numbers<[1], [0], [0], [1], [0, 0, 1, 1], [], []>} : vector<16x32xf32>, vector<32x128xf32>, vector<16x128xf32> -> vector<16x128xf32>
    %70 = vector.broadcast %10 : vector<1x128xf32> to vector<16x128xf32>
    %71 = arith.addf %69, %70 : vector<16x128xf32>
    %c0_41 = arith.constant 0 : index
    %c0_42 = arith.constant 0 : index
    %72 = vector.load %arg5[%c0_41, %c0_42] : memref<16x128xf32, #tpu.memory_space<vmem>>, vector<16x128xf32>
    tpu.vector_store %arg5[%c0_41, %c0_42], %71 {strides = array<i32>} : memref<16x128xf32, #tpu.memory_space<vmem>>, vector<16x128xf32>,
    return
  }
}

</mosaic_0001>

<llo_original>
// kernel: run_fused.1
$region0: #{run_fused.1}
  #allocation0 [shape = 'u32[]', space=smem, size = 0x4, offset = 0x4, fixed_abs, tag = 'smem constant byte address 0x4 - core index']
  #allocation1 [shape = 'u32[144,128]{1,0:T(1,128)}', space=vmem, size = 0x12000, scoped, tag = 'internal scratch']
  %s0 = inlined_call_operand.vmem [shape: f32[16,3], index: 0, kind: input, shape index: {}]
  %s1 = inlined_call_operand.vmem [shape: f32[16,16], index: 1, kind: input, shape index: {}]
  %s2 = inlined_call_operand.vmem [shape: f32[2,16], index: 2, kind: input, shape index: {}]
  %s3 = inlined_call_operand.vmem [shape: f32[16,2], index: 3, kind: input, shape index: {}]
  %s4 = inlined_call_operand.hbm [shape: f32[160,128], index: 4, kind: input, shape index: {}]
  %s5 = inlined_call_operand.vmem [shape: f32[16,128], index: 5, kind: output, shape index: {}]
  %s6 = sld [smem:[#allocation0]]
  $region34: #{run_fused.1} parent=0
    _
  %s8 = ssub.s32 1, %s6
  %s9 = scalar_select 0, %s8, %s6
  $region1: #{run_fused.1} parent=0
    #allocation2 [shape = 'u8[81920]{0}', space=vmem, size = 0x14000, scoped, tag = 'input window, operand 4, single buffered']
    #allocation3 [shape = 's32[1]{0}', space=sflag, size = 0x4, scoped, tag = 'scoped memory for run_fused.1']
    %10 = vsyncpa [#allocation3], 0
    // Predicated region
    $region2: #{run_fused.1} parent=1 // pred_check
      _
    $region3: #{run_fused.1} parent=1 // pred_check_branch
      %12 = sbr.rel (0) target = $region5
    $region4: #{run_fused.1} parent=1 // pred_region
      _
    $region5: #{run_fused.1} parent=1 // pred_fallthru
      _
    // Predicated region
    $region6: #{run_fused.1} parent=1 // pred_check
      _
    $region7: #{run_fused.1} parent=1 // pred_check_branch
      %14 = sbr.rel (0) target = $region9
    $region8: #{run_fused.1} parent=1 // pred_region
      _
    $region9: #{run_fused.1} parent=1 // pred_fallthru
      _
    // Predicated region
    $region10: #{run_fused.1} parent=1 // pred_check
      _
    $region11: #{run_fused.1} parent=1 // pred_check_branch
      %16 = sbr.rel (0) target = $region13
    $region12: #{run_fused.1} parent=1 // pred_region
      _
    $region13: #{run_fused.1} parent=1 // pred_fallthru
      _
    // Predicated region
    $region14: #{run_fused.1} parent=1 // pred_check
      _
    $region15: #{run_fused.1} parent=1 // pred_check_branch
      %18 = sbr.rel (0) target = $region17
    $region16: #{run_fused.1} parent=1 // pred_region
      _
    $region17: #{run_fused.1} parent=1 // pred_fallthru
      _
    // Predicated region
    $region18: #{run_fused.1} parent=1 // pred_check
      _
    $region19: #{run_fused.1} parent=1 // pred_check_branch
      %20 = sbr.rel (0) target = $region21
    $region20: #{run_fused.1} parent=1 // pred_region
      %s22 = ssub.s32 2560, 2560
      %23 = vsyncadd [#allocation3], %s22
      %s24 = sshll.u32 [#allocation2], 4
      %s25 = int_to_ptr.vmem [resolvable:$true] %s24
      %30 = dma.hbm_to_vmem [thread:$0]  %s4, 2560, %s25, [#allocation3], 128, 128, 8
    $region21: #{run_fused.1} parent=1 // pred_fallthru
      _
    // Predicated region
    $region22: #{run_fused.1} parent=1 // pred_check
      _
    $region23: #{run_fused.1} parent=1 // pred_check_branch
      %32 = sbr.rel (0) target = $region25
    $region24: #{run_fused.1} parent=1 // pred_region
      %33 = dma.done [#allocation3], 2560
    $region25: #{run_fused.1} parent=1 // pred_fallthru
      _
    %v34 = vld [vmem:[#allocation2] sm:$0x7]
    %v35 = vld [vmem:[#allocation2 + $0x8] sm:$0x1]
    %v36 = vld [vmem:[#allocation2 + $0x9] sm:$0x1]
    %v37 = vld [vmem:[#allocation2 + $0x10] sm:$0xff]
    %v38 = vld [vmem:[#allocation2 + $0x18] sm:$0xff]
    %v39 = vld [vmem:[#allocation2 + $0x20] sm:$0xff]
    %v40 = vld [vmem:[#allocation2 + $0x28] sm:$0xff]
    %v41 = vld [vmem:[#allocation2 + $0x30] sm:$0xff]
    %v42 = vld [vmem:[#allocation2 + $0x38] sm:$0xff]
    %v43 = vld [vmem:[#allocation2 + $0x40] sm:$0xff]
    %v44 = vld [vmem:[#allocation2 + $0x48] sm:$0xff]
    %v45 = vld [vmem:[#allocation2 + $0x50] sm:$0xff]
    %v46 = vld [vmem:[#allocation2 + $0x58] sm:$0xff]
    %v47 = vld [vmem:[#allocation2 + $0x60] sm:$0xff]
    %v48 = vld [vmem:[#allocation2 + $0x68] sm:$0xff]
    %v49 = vld [vmem:[#allocation2 + $0x70] sm:$0x1]
    %v50 = vld [vmem:[#allocation2 + $0x71] sm:$0x1]
    %v51 = vld [vmem:[#allocation2 + $0x72] sm:$0x1]
    %v52 = vld [vmem:[#allocation2 + $0x78] sm:$0xff]
    %v53 = vld [vmem:[#allocation2 + $0x80] sm:$0xff]
    %v54 = vld [vmem:[#allocation2 + $0x88] sm:$0xff]
    %v55 = vld [vmem:[#allocation2 + $0x90] sm:$0xff]
    %v56 = vld [vmem:[#allocation2 + $0x98] sm:$0x1]
    %v57 = vld [vmem:[%s0] sm:$0xff]
    %v58 = vld [vmem:[%s0 + $0x8] sm:$0xff]
    %v59 = vlaneseq
    %v60 = vshrl.u32 %v59, 7
    %v61 = vsub.s32 0, %v60
    %v62 = vrot.slane %v35, %v61
    %vm63 = vcmask 23552
    %v65 = vsel %vm63, %v57, 0
    %v68 = vsel %vm63, %v58, 0
    %vm70 = vcmask 1042432
    %v72 = vsel %vm70, %v34, 0
    %74 = vmatprep.subr.mxu0 0.0
    %75 = vmatpush1.msra.mxu0 %v72
    %76 = vmatprep.subr.mxu0 0.0
    %77 = vmatpush1.msra.mxu0 0.0
    %78 = vmatprep.subr.mxu0 0.0
    %79 = vmatpush1.msra.mxu0 0.0
    %80 = vmatprep.subr.mxu0 0.0
    %81 = vmatpush1.msra.mxu0 0.0
    %82 = vmatprep.subr.mxu0 0.0
    %83 = vmatpush1.msra.mxu0 0.0
    %84 = vmatprep.subr.mxu0 0.0
    %85 = vmatpush1.msra.mxu0 0.0
    %86 = vmatprep.subr.mxu0 0.0
    %87 = vmatpush1.msra.mxu0 0.0
    %88 = vmatprep.subr.mxu0 0.0
    %89 = vmatpush1.msra.mxu0 0.0
    %90 = vmatprep.subr.mxu0 0.0
    %91 = vmatpush1.msra.mxu0 0.0
    %92 = vmatprep.subr.mxu0 0.0
    %93 = vmatpush1.msra.mxu0 0.0
    %94 = vmatprep.subr.mxu0 0.0
    %95 = vmatpush1.msra.mxu0 0.0
    %96 = vmatprep.subr.mxu0 0.0
    %97 = vmatpush1.msra.mxu0 0.0
    %98 = vmatprep.subr.mxu0 0.0
    %99 = vmatpush1.msra.mxu0 0.0
    %100 = vmatprep.subr.mxu0 0.0
    %101 = vmatpush1.msra.mxu0 0.0
    %102 = vmatprep.subr.mxu0 0.0
    %103 = vmatpush1.msra.mxu0 0.0
    %104 = vmatprep.subr.mxu0 0.0
    %105 = vmatpush1.msra.mxu0 0.0
    %106 = vmatprep.subr.mxu0 0.0
    %107 = vmatpush1.msra.mxu0 0.0
    %108 = vmatprep.subr.mxu0 0.0
    %109 = vmatpush1.msra.mxu0 0.0
    %110 = vmatprep.subr.mxu0 0.0
    %111 = vmatpush1.msra.mxu0 0.0
    %112 = vmatprep.subr.mxu0 0.0
    %113 = vmatpush1.msra.mxu0 0.0
    %114 = vmatprep.subr.mxu0 0.0
    %115 = vmatpush1.msra.mxu0 0.0
    %116 = vmatprep.subr.mxu0 0.0
    %117 = vmatpush1.msra.mxu0 0.0
    %118 = vmatprep.subr.mxu0 0.0
    %119 = vmatpush1.msra.mxu0 0.0
    %120 = vmatprep.subr.mxu0 0.0
    %121 = vmatpush1.msra.mxu0 0.0
    %122 = vmatprep.subr.mxu0 0.0
    %123 = vmatpush1.msra.mxu0 0.0
    %124 = vmatprep.subr.mxu0 0.0
    %125 = vmatpush1.msra.mxu0 0.0
    %126 = vmatprep.subr.mxu0 0.0
    %127 = vmatpush1.msra.mxu0 0.0
    %128 = vmatprep.subr.mxu0 0.0
    %129 = vmatpush1.msra.mxu0 0.0
    %130 = vmatprep.subr.mxu0 0.0
    %131 = vmatpush1.msra.mxu0 0.0
    %132 = vmatprep.subr.mxu0 0.0
    %133 = vmatpush1.msra.mxu0 0.0
    %134 = vmatprep.subr.mxu0 0.0
    %135 = vmatpush1.msra.mxu0 0.0
    %136 = vmatprep.subr.mxu0 0.0
    %137 = vmatpush1.msra.mxu0 0.0
    %138 = vmatprep.mubr.f32.mxu0 0.0
    %139 = vmatmul.mubr.f32.gmra.mrb[0].mxu0 %v65
    %v140 = vpop.f32.mrb[0].mxu0
    %v141 = vadd.f32 %v62, %v140
    %v142 = vpop.f32.mrb[0].mxu0
    %143 = vmatprep.mubr.f32.mxu0 0.0
    %144 = vmatmul.mubr.f32.gmra.mrb[0].mxu0 %v68
    %v145 = vpop.f32.mrb[0].mxu0
    %v146 = vadd.f32 %v62, %v145
    %v147 = vpop.f32.mrb[0].mxu0
    %148 = vdwg.mxu0
    %v149 = vmax.f32 %v141, 0.0
    %v150 = vmax.f32 %v146, 0.0
    %v151 = vlaneseq
    %v152 = vshrl.u32 %v151, 7
    %v153 = vsub.s32 0, %v152
    %v154 = vrot.slane %v36, %v153
    %v155 = vadd.f32 %v141, %v154
    %v156 = vadd.f32 %v146, %v154
    %v157 = vld [vmem:[%s1] sm:$0xff]
    %v158 = vld [vmem:[%s1 + $0x8] sm:$0xff]
    %vm159 = vcmask 130048
    %v161 = vsel %vm159, %v157, 0
    %v164 = vsel %vm159, %v158, 0
    %166 = vmatprep.subr.mxu0 0.0
    %167 = vmatpush1.msra.mxu0 %v149
    %168 = vmatprep.subr.mxu0 0.0
    %169 = vmatpush1.msra.mxu0 %v150
    %170 = vmatprep.subr.mxu0 0.0
    %171 = vmatpush1.msra.mxu0 0.0
    %172 = vmatprep.subr.mxu0 0.0
    %173 = vmatpush1.msra.mxu0 0.0
    %174 = vmatprep.subr.mxu0 0.0
    %175 = vmatpush1.msra.mxu0 0.0
    %176 = vmatprep.subr.mxu0 0.0
    %177 = vmatpush1.msra.mxu0 0.0
    %178 = vmatprep.subr.mxu0 0.0
    %179 = vmatpush1.msra.mxu0 0.0
    %180 = vmatprep.subr.mxu0 0.0
    %181 = vmatpush1.msra.mxu0 0.0
    %182 = vmatprep.subr.mxu0 0.0
    %183 = vmatpush1.msra.mxu0 0.0
    %184 = vmatprep.subr.mxu0 0.0
    %185 = vmatpush1.msra.mxu0 0.0
    %186 = vmatprep.subr.mxu0 0.0
    %187 = vmatpush1.msra.mxu0 0.0
    %188 = vmatprep.subr.mxu0 0.0
    %189 = vmatpush1.msra.mxu0 0.0
    %190 = vmatprep.subr.mxu0 0.0
    %191 = vmatpush1.msra.mxu0 0.0
    %192 = vmatprep.subr.mxu0 0.0
    %193 = vmatpush1.msra.mxu0 0.0
    %194 = vmatprep.subr.mxu0 0.0
    %195 = vmatpush1.msra.mxu0 0.0
    %196 = vmatprep.subr.mxu0 0.0
    %197 = vmatpush1.msra.mxu0 0.0
    %198 = vmatprep.subr.mxu0 0.0
    %199 = vmatpush1.msra.mxu0 0.0
    %200 = vmatprep.subr.mxu0 0.0
    %201 = vmatpush1.msra.mxu0 0.0
    %202 = vmatprep.subr.mxu0 0.0
    %203 = vmatpush1.msra.mxu0 0.0
    %204 = vmatprep.subr.mxu0 0.0
    %205 = vmatpush1.msra.mxu0 0.0
    %206 = vmatprep.subr.mxu0 0.0
    %207 = vmatpush1.msra.mxu0 0.0
    %208 = vmatprep.subr.mxu0 0.0
    %209 = vmatpush1.msra.mxu0 0.0
    %210 = vmatprep.subr.mxu0 0.0
    %211 = vmatpush1.msra.mxu0 0.0
    %212 = vmatprep.subr.mxu0 0.0
    %213 = vmatpush1.msra.mxu0 0.0
    %214 = vmatprep.subr.mxu0 0.0
    %215 = vmatpush1.msra.mxu0 0.0
    %216 = vmatprep.subr.mxu0 0.0
    %217 = vmatpush1.msra.mxu0 0.0
    %218 = vmatprep.subr.mxu0 0.0
    %219 = vmatpush1.msra.mxu0 0.0
    %220 = vmatprep.subr.mxu0 0.0
    %221 = vmatpush1.msra.mxu0 0.0
    %222 = vmatprep.subr.mxu0 0.0
    %223 = vmatpush1.msra.mxu0 0.0
    %224 = vmatprep.subr.mxu0 0.0
    %225 = vmatpush1.msra.mxu0 0.0
    %226 = vmatprep.subr.mxu0 0.0
    %227 = vmatpush1.msra.mxu0 0.0
    %228 = vmatprep.subr.mxu0 0.0
    %229 = vmatpush1.msra.mxu0 0.0
    %230 = vmatprep.mubr.f32.mxu0 0.0
    %231 = vmatmul.mubr.f32.gmra.mrb[0].mxu0 %v161
    %v232 = vpop.f32.mrb[0].mxu0
    %v233 = vadd.f32 0.0, %v232
    %v234 = vpop.f32.mrb[0].mxu0
    %235 = vmatprep.mubr.f32.mxu0 0.0
    %236 = vmatmul.mubr.f32.gmra.mrb[0].mxu0 %v164
    %v237 = vpop.f32.mrb[0].mxu0
    %v238 = vadd.f32 0.0, %v237
    %v239 = vpop.f32.mrb[0].mxu0
    %240 = vdwg.mxu0
    %vm241 = vcmask 261120
    %v243 = vsel %vm241, %v233, 0
    %v246 = vsel %vm241, %v238, 0
    %248 = vmatprep.subr.mxu0 0.0
    %249 = vmatpush1.msra.mxu0 %v37
    %250 = vmatprep.subr.mxu0 0.0
    %251 = vmatpush1.msra.mxu0 %v38
    %252 = vmatprep.subr.mxu0 0.0
    %253 = vmatpush1.msra.mxu0 %v39
    %254 = vmatprep.subr.mxu0 0.0
    %255 = vmatpush1.msra.mxu0 %v40
    %256 = vmatprep.subr.mxu0 0.0
    %257 = vmatpush1.msra.mxu0 0.0
    %258 = vmatprep.subr.mxu0 0.0
    %259 = vmatpush1.msra.mxu0 0.0
    %260 = vmatprep.subr.mxu0 0.0
    %261 = vmatpush1.msra.mxu0 0.0
    %262 = vmatprep.subr.mxu0 0.0
    %263 = vmatpush1.msra.mxu0 0.0
    %264 = vmatprep.subr.mxu0 0.0
    %265 = vmatpush1.msra.mxu0 0.0
    %266 = vmatprep.subr.mxu0 0.0
    %267 = vmatpush1.msra.mxu0 0.0
    %268 = vmatprep.subr.mxu0 0.0
    %269 = vmatpush1.msra.mxu0 0.0
    %270 = vmatprep.subr.mxu0 0.0
    %271 = vmatpush1.msra.mxu0 0.0
    %272 = vmatprep.subr.mxu0 0.0
    %273 = vmatpush1.msra.mxu0 0.0
    %274 = vmatprep.subr.mxu0 0.0
    %275 = vmatpush1.msra.mxu0 0.0
    %276 = vmatprep.subr.mxu0 0.0
    %277 = vmatpush1.msra.mxu0 0.0
    %278 = vmatprep.subr.mxu0 0.0
    %279 = vmatpush1.msra.mxu0 0.0
    %280 = vmatprep.subr.mxu0 0.0
    %281 = vmatpush1.msra.mxu0 0.0
    %282 = vmatprep.subr.mxu0 0.0
    %283 = vmatpush1.msra.mxu0 0.0
    %284 = vmatprep.subr.mxu0 0.0
    %285 = vmatpush1.msra.mxu0 0.0
    %286 = vmatprep.subr.mxu0 0.0
    %287 = vmatpush1.msra.mxu0 0.0
    %288 = vmatprep.subr.mxu0 0.0
    %289 = vmatpush1.msra.mxu0 0.0
    %290 = vmatprep.subr.mxu0 0.0
    %291 = vmatpush1.msra.mxu0 0.0
    %292 = vmatprep.subr.mxu0 0.0
    %293 = vmatpush1.msra.mxu0 0.0
    %294 = vmatprep.subr.mxu0 0.0
    %295 = vmatpush1.msra.mxu0 0.0
    %296 = vmatprep.subr.mxu0 0.0
    %297 = vmatpush1.msra.mxu0 0.0
    %298 = vmatprep.subr.mxu0 0.0
    %299 = vmatpush1.msra.mxu0 0.0
    %300 = vmatprep.subr.mxu0 0.0
    %301 = vmatpush1.msra.mxu0 0.0
    %302 = vmatprep.subr.mxu0 0.0
    %303 = vmatpush1.msra.mxu0 0.0
    %304 = vmatprep.subr.mxu0 0.0
    %305 = vmatpush1.msra.mxu0 0.0
    %306 = vmatprep.subr.mxu0 0.0
    %307 = vmatpush1.msra.mxu0 0.0
    %308 = vmatprep.subr.mxu0 0.0
    %309 = vmatpush1.msra.mxu0 0.0
    %310 = vmatprep.subr.mxu0 0.0
    %311 = vmatpush1.msra.mxu0 0.0
    %312 = vmatprep.mubr.f32.mxu0 0.0
    %313 = vmatmul.mubr.f32.gmra.mrb[0].mxu0 %v243
    %v314 = vpop.f32.mrb[0].mxu0
    %v315 = vadd.f32 %v155, %v314
    %v316 = vpop.f32.mrb[0].mxu0
    %317 = vmatprep.mubr.f32.mxu0 0.0
    %318 = vmatmul.mubr.f32.gmra.mrb[0].mxu0 %v246
    %v319 = vpop.f32.mrb[0].mxu0
    %v320 = vadd.f32 %v156, %v319
    %v321 = vpop.f32.mrb[0].mxu0
    %322 = vdwg.mxu0
    %v323 = vmax.f32 %v315, 0.0
    %v324 = vmax.f32 %v320, 0.0
    %325 = vmatprep.subr.mxu0 0.0
    %326 = vmatpush1.msra.mxu0 %v323
    %327 = vmatprep.subr.mxu0 0.0
    %328 = vmatpush1.msra.mxu0 %v324
    %329 = vmatprep.subr.mxu0 0.0
    %330 = vmatpush1.msra.mxu0 0.0
    %331 = vmatprep.subr.mxu0 0.0
    %332 = vmatpush1.msra.mxu0 0.0
    %333 = vmatprep.subr.mxu0 0.0
    %334 = vmatpush1.msra.mxu0 0.0
    %335 = vmatprep.subr.mxu0 0.0
    %336 = vmatpush1.msra.mxu0 0.0
    %337 = vmatprep.subr.mxu0 0.0
    %338 = vmatpush1.msra.mxu0 0.0
    %339 = vmatprep.subr.mxu0 0.0
    %340 = vmatpush1.msra.mxu0 0.0
    %341 = vmatprep.subr.mxu0 0.0
    %342 = vmatpush1.msra.mxu0 0.0
    %343 = vmatprep.subr.mxu0 0.0
    %344 = vmatpush1.msra.mxu0 0.0
    %345 = vmatprep.subr.mxu0 0.0
    %346 = vmatpush1.msra.mxu0 0.0
    %347 = vmatprep.subr.mxu0 0.0
    %348 = vmatpush1.msra.mxu0 0.0
    %349 = vmatprep.subr.mxu0 0.0
    %350 = vmatpush1.msra.mxu0 0.0
    %351 = vmatprep.subr.mxu0 0.0
    %352 = vmatpush1.msra.mxu0 0.0
    %353 = vmatprep.subr.mxu0 0.0
    %354 = vmatpush1.msra.mxu0 0.0
    %355 = vmatprep.subr.mxu0 0.0
    %356 = vmatpush1.msra.mxu0 0.0
    %357 = vmatprep.subr.mxu0 0.0
    %358 = vmatpush1.msra.mxu0 0.0
    %359 = vmatprep.subr.mxu0 0.0
    %360 = vmatpush1.msra.mxu0 0.0
    %361 = vmatprep.subr.mxu0 0.0
    %362 = vmatpush1.msra.mxu0 0.0
    %363 = vmatprep.subr.mxu0 0.0
    %364 = vmatpush1.msra.mxu0 0.0
    %365 = vmatprep.subr.mxu0 0.0
    %366 = vmatpush1.msra.mxu0 0.0
    %367 = vmatprep.subr.mxu0 0.0
    %368 = vmatpush1.msra.mxu0 0.0
    %369 = vmatprep.subr.mxu0 0.0
    %370 = vmatpush1.msra.mxu0 0.0
    %371 = vmatprep.subr.mxu0 0.0
    %372 = vmatpush1.msra.mxu0 0.0
    %373 = vmatprep.subr.mxu0 0.0
    %374 = vmatpush1.msra.mxu0 0.0
    %375 = vmatprep.subr.mxu0 0.0
    %376 = vmatpush1.msra.mxu0 0.0
    %377 = vmatprep.subr.mxu0 0.0
    %378 = vmatpush1.msra.mxu0 0.0
    %379 = vmatprep.subr.mxu0 0.0
    %380 = vmatpush1.msra.mxu0 0.0
    %381 = vmatprep.subr.mxu0 0.0
    %382 = vmatpush1.msra.mxu0 0.0
    %383 = vmatprep.subr.mxu0 0.0
    %384 = vmatpush1.msra.mxu0 0.0
    %385 = vmatprep.subr.mxu0 0.0
    %386 = vmatpush1.msra.mxu0 0.0
    %387 = vmatprep.subr.mxu0 0.0
    %388 = vmatpush1.msra.mxu0 0.0
    %389 = vmatprep.mubr.f32.mxu0 0.0
    %390 = vmatmul.mubr.f32.gmra.mrb[0].mxu0 %v161
    %v391 = vpop.f32.mrb[0].mxu0
    %v392 = vadd.f32 0.0, %v391
    %v393 = vpop.f32.mrb[0].mxu0
    %394 = vmatprep.mubr.f32.mxu0 0.0
    %395 = vmatmul.mubr.f32.gmra.mrb[0].mxu0 %v164
    %v396 = vpop.f32.mrb[0].mxu0
    %v397 = vadd.f32 0.0, %v396
    %v398 = vpop.f32.mrb[0].mxu0
    %399 = vdwg.mxu0
    %v401 = vsel %vm241, %v392, 0
    %v404 = vsel %vm241, %v397, 0
    %406 = vmatprep.subr.mxu0 0.0
    %407 = vmatpush1.msra.mxu0 %v37
    %408 = vmatprep.subr.mxu0 0.0
    %409 = vmatpush1.msra.mxu0 %v38
    %410 = vmatprep.subr.mxu0 0.0
    %411 = vmatpush1.msra.mxu0 %v39
    %412 = vmatprep.subr.mxu0 0.0
    %413 = vmatpush1.msra.mxu0 %v40
    %414 = vmatprep.subr.mxu0 0.0
    %415 = vmatpush1.msra.mxu0 0.0
    %416 = vmatprep.subr.mxu0 0.0
    %417 = vmatpush1.msra.mxu0 0.0
    %418 = vmatprep.subr.mxu0 0.0
    %419 = vmatpush1.msra.mxu0 0.0
    %420 = vmatprep.subr.mxu0 0.0
    %421 = vmatpush1.msra.mxu0 0.0
    %422 = vmatprep.subr.mxu0 0.0
    %423 = vmatpush1.msra.mxu0 0.0
    %424 = vmatprep.subr.mxu0 0.0
    %425 = vmatpush1.msra.mxu0 0.0
    %426 = vmatprep.subr.mxu0 0.0
    %427 = vmatpush1.msra.mxu0 0.0
    %428 = vmatprep.subr.mxu0 0.0
    %429 = vmatpush1.msra.mxu0 0.0
    %430 = vmatprep.subr.mxu0 0.0
    %431 = vmatpush1.msra.mxu0 0.0
    %432 = vmatprep.subr.mxu0 0.0
    %433 = vmatpush1.msra.mxu0 0.0
    %434 = vmatprep.subr.mxu0 0.0
    %435 = vmatpush1.msra.mxu0 0.0
    %436 = vmatprep.subr.mxu0 0.0
    %437 = vmatpush1.msra.mxu0 0.0
    %438 = vmatprep.subr.mxu0 0.0
    %439 = vmatpush1.msra.mxu0 0.0
    %440 = vmatprep.subr.mxu0 0.0
    %441 = vmatpush1.msra.mxu0 0.0
    %442 = vmatprep.subr.mxu0 0.0
    %443 = vmatpush1.msra.mxu0 0.0
    %444 = vmatprep.subr.mxu0 0.0
    %445 = vmatpush1.msra.mxu0 0.0
    %446 = vmatprep.subr.mxu0 0.0
    %447 = vmatpush1.msra.mxu0 0.0
    %448 = vmatprep.subr.mxu0 0.0
    %449 = vmatpush1.msra.mxu0 0.0
    %450 = vmatprep.subr.mxu0 0.0
    %451 = vmatpush1.msra.mxu0 0.0
    %452 = vmatprep.subr.mxu0 0.0
    %453 = vmatpush1.msra.mxu0 0.0
    %454 = vmatprep.subr.mxu0 0.0
    %455 = vmatpush1.msra.mxu0 0.0
    %456 = vmatprep.subr.mxu0 0.0
    %457 = vmatpush1.msra.mxu0 0.0
    %458 = vmatprep.subr.mxu0 0.0
    %459 = vmatpush1.msra.mxu0 0.0
    %460 = vmatprep.subr.mxu0 0.0
    %461 = vmatpush1.msra.mxu0 0.0
    %462 = vmatprep.subr.mxu0 0.0
    %463 = vmatpush1.msra.mxu0 0.0
    %464 = vmatprep.subr.mxu0 0.0
    %465 = vmatpush1.msra.mxu0 0.0
    %466 = vmatprep.subr.mxu0 0.0
    %467 = vmatpush1.msra.mxu0 0.0
    %468 = vmatprep.subr.mxu0 0.0
    %469 = vmatpush1.msra.mxu0 0.0
    %470 = vmatprep.mubr.f32.mxu0 0.0
    %471 = vmatmul.mubr.f32.gmra.mrb[0].mxu0 %v401
    %v472 = vpop.f32.mrb[0].mxu0
    %v473 = vadd.f32 %v155, %v472
    %v474 = vpop.f32.mrb[0].mxu0
    %475 = vmatprep.mubr.f32.mxu0 0.0
    %476 = vmatmul.mubr.f32.gmra.mrb[0].mxu0 %v404
    %v477 = vpop.f32.mrb[0].mxu0
    %v478 = vadd.f32 %v156, %v477
    %v479 = vpop.f32.mrb[0].mxu0
    %480 = vdwg.mxu0
    %v481 = vmax.f32 %v473, 0.0
    %v482 = vmax.f32 %v478, 0.0
    %483 = vmatprep.subr.mxu0 0.0
    %484 = vmatpush1.msra.mxu0 %v481
    %485 = vmatprep.subr.mxu0 0.0
    %486 = vmatpush1.msra.mxu0 %v482
    %487 = vmatprep.subr.mxu0 0.0
    %488 = vmatpush1.msra.mxu0 0.0
    %489 = vmatprep.subr.mxu0 0.0
    %490 = vmatpush1.msra.mxu0 0.0
    %491 = vmatprep.subr.mxu0 0.0
    %492 = vmatpush1.msra.mxu0 0.0
    %493 = vmatprep.subr.mxu0 0.0
    %494 = vmatpush1.msra.mxu0 0.0
    %495 = vmatprep.subr.mxu0 0.0
    %496 = vmatpush1.msra.mxu0 0.0
    %497 = vmatprep.subr.mxu0 0.0
    %498 = vmatpush1.msra.mxu0 0.0
    %499 = vmatprep.subr.mxu0 0.0
    %500 = vmatpush1.msra.mxu0 0.0
    %501 = vmatprep.subr.mxu0 0.0
    %502 = vmatpush1.msra.mxu0 0.0
    %503 = vmatprep.subr.mxu0 0.0
    %504 = vmatpush1.msra.mxu0 0.0
    %505 = vmatprep.subr.mxu0 0.0
    %506 = vmatpush1.msra.mxu0 0.0
    %507 = vmatprep.subr.mxu0 0.0
    %508 = vmatpush1.msra.mxu0 0.0
    %509 = vmatprep.subr.mxu0 0.0
    %510 = vmatpush1.msra.mxu0 0.0
    %511 = vmatprep.subr.mxu0 0.0
    %512 = vmatpush1.msra.mxu0 0.0
    %513 = vmatprep.subr.mxu0 0.0
    %514 = vmatpush1.msra.mxu0 0.0
    %515 = vmatprep.subr.mxu0 0.0
    %516 = vmatpush1.msra.mxu0 0.0
    %517 = vmatprep.subr.mxu0 0.0
    %518 = vmatpush1.msra.mxu0 0.0
    %519 = vmatprep.subr.mxu0 0.0
    %520 = vmatpush1.msra.mxu0 0.0
    %521 = vmatprep.subr.mxu0 0.0
    %522 = vmatpush1.msra.mxu0 0.0
    %523 = vmatprep.subr.mxu0 0.0
    %524 = vmatpush1.msra.mxu0 0.0
    %525 = vmatprep.subr.mxu0 0.0
    %526 = vmatpush1.msra.mxu0 0.0
    %527 = vmatprep.subr.mxu0 0.0
    %528 = vmatpush1.msra.mxu0 0.0
    %529 = vmatprep.subr.mxu0 0.0
    %530 = vmatpush1.msra.mxu0 0.0
    %531 = vmatprep.subr.mxu0 0.0
    %532 = vmatpush1.msra.mxu0 0.0
    %533 = vmatprep.subr.mxu0 0.0
    %534 = vmatpush1.msra.mxu0 0.0
    %535 = vmatprep.subr.mxu0 0.0
    %536 = vmatpush1.msra.mxu0 0.0
    %537 = vmatprep.subr.mxu0 0.0
    %538 = vmatpush1.msra.mxu0 0.0
    %539 = vmatprep.subr.mxu0 0.0
    %540 = vmatpush1.msra.mxu0 0.0
    %541 = vmatprep.subr.mxu0 0.0
    %542 = vmatpush1.msra.mxu0 0.0
    %543 = vmatprep.subr.mxu0 0.0
    %544 = vmatpush1.msra.mxu0 0.0
    %545 = vmatprep.subr.mxu0 0.0
    %546 = vmatpush1.msra.mxu0 0.0
    %547 = vmatprep.mubr.f32.mxu0 0.0
    %548 = vmatmul.mubr.f32.gmra.mrb[0].mxu0 %v161
    %v549 = vpop.f32.mrb[0].mxu0
    %v550 = vadd.f32 0.0, %v549
    %v551 = vpop.f32.mrb[0].mxu0
    %552 = vmatprep.mubr.f32.mxu0 0.0
    %553 = vmatmul.mubr.f32.gmra.mrb[0].mxu0 %v164
    %v554 = vpop.f32.mrb[0].mxu0
    %v555 = vadd.f32 0.0, %v554
    %v556 = vpop.f32.mrb[0].mxu0
    %557 = vdwg.mxu0
    %v559 = vsel %vm241, %v550, 0
    %v562 = vsel %vm241, %v555, 0
    %564 = vmatprep.subr.mxu0 0.0
    %565 = vmatpush1.msra.mxu0 %v37
    %566 = vmatprep.subr.mxu0 0.0
    %567 = vmatpush1.msra.mxu0 %v38
    %568 = vmatprep.subr.mxu0 0.0
    %569 = vmatpush1.msra.mxu0 %v39
    %570 = vmatprep.subr.mxu0 0.0
    %571 = vmatpush1.msra.mxu0 %v40
    %572 = vmatprep.subr.mxu0 0.0
    %573 = vmatpush1.msra.mxu0 0.0
    %574 = vmatprep.subr.mxu0 0.0
    %575 = vmatpush1.msra.mxu0 0.0
    %576 = vmatprep.subr.mxu0 0.0
    %577 = vmatpush1.msra.mxu0 0.0
    %578 = vmatprep.subr.mxu0 0.0
    %579 = vmatpush1.msra.mxu0 0.0
    %580 = vmatprep.subr.mxu0 0.0
    %581 = vmatpush1.msra.mxu0 0.0
    %582 = vmatprep.subr.mxu0 0.0
    %583 = vmatpush1.msra.mxu0 0.0
    %584 = vmatprep.subr.mxu0 0.0
    %585 = vmatpush1.msra.mxu0 0.0
    %586 = vmatprep.subr.mxu0 0.0
    %587 = vmatpush1.msra.mxu0 0.0
    %588 = vmatprep.subr.mxu0 0.0
    %589 = vmatpush1.msra.mxu0 0.0
    %590 = vmatprep.subr.mxu0 0.0
    %591 = vmatpush1.msra.mxu0 0.0
    %592 = vmatprep.subr.mxu0 0.0
    %593 = vmatpush1.msra.mxu0 0.0
    %594 = vmatprep.subr.mxu0 0.0
    %595 = vmatpush1.msra.mxu0 0.0
    %596 = vmatprep.subr.mxu0 0.0
    %597 = vmatpush1.msra.mxu0 0.0
    %598 = vmatprep.subr.mxu0 0.0
    %599 = vmatpush1.msra.mxu0 0.0
    %600 = vmatprep.subr.mxu0 0.0
    %601 = vmatpush1.msra.mxu0 0.0
    %602 = vmatprep.subr.mxu0 0.0
    %603 = vmatpush1.msra.mxu0 0.0
    %604 = vmatprep.subr.mxu0 0.0
    %605 = vmatpush1.msra.mxu0 0.0
    %606 = vmatprep.subr.mxu0 0.0
    %607 = vmatpush1.msra.mxu0 0.0
    %608 = vmatprep.subr.mxu0 0.0
    %609 = vmatpush1.msra.mxu0 0.0
    %610 = vmatprep.subr.mxu0 0.0
    %611 = vmatpush1.msra.mxu0 0.0
    %612 = vmatprep.subr.mxu0 0.0
    %613 = vmatpush1.msra.mxu0 0.0
    %614 = vmatprep.subr.mxu0 0.0
    %615 = vmatpush1.msra.mxu0 0.0
    %616 = vmatprep.subr.mxu0 0.0
    %617 = vmatpush1.msra.mxu0 0.0
    %618 = vmatprep.subr.mxu0 0.0
    %619 = vmatpush1.msra.mxu0 0.0
    %620 = vmatprep.subr.mxu0 0.0
    %621 = vmatpush1.msra.mxu0 0.0
    %622 = vmatprep.subr.mxu0 0.0
    %623 = vmatpush1.msra.mxu0 0.0
    %624 = vmatprep.subr.mxu0 0.0
    %625 = vmatpush1.msra.mxu0 0.0
    %626 = vmatprep.subr.mxu0 0.0
    %627 = vmatpush1.msra.mxu0 0.0
    %628 = vmatprep.mubr.f32.mxu0 0.0
    %629 = vmatmul.mubr.f32.gmra.mrb[0].mxu0 %v559
    %v630 = vpop.f32.mrb[0].mxu0
    %v631 = vadd.f32 %v155, %v630
    %v632 = vpop.f32.mrb[0].mxu0
    %633 = vmatprep.mubr.f32.mxu0 0.0
    %634 = vmatmul.mubr.f32.gmra.mrb[0].mxu0 %v562
    %v635 = vpop.f32.mrb[0].mxu0
    %v636 = vadd.f32 %v156, %v635
    %v637 = vpop.f32.mrb[0].mxu0
    %638 = vdwg.mxu0
    %v639 = vmax.f32 %v631, 0.0
    %v640 = vmax.f32 %v636, 0.0
    %v641 = vld [vmem:[%s2] sm:$0x3]
    %v643 = vsel %vm159, %v641, 0
    %645 = vmatprep.subr.mxu0 0.0
    %646 = vmatpush1.msra.mxu0 %v639
    %647 = vmatprep.subr.mxu0 0.0
    %648 = vmatpush1.msra.mxu0 %v640
    %649 = vmatprep.subr.mxu0 0.0
    %650 = vmatpush1.msra.mxu0 0.0
    %651 = vmatprep.subr.mxu0 0.0
    %652 = vmatpush1.msra.mxu0 0.0
    %653 = vmatprep.subr.mxu0 0.0
    %654 = vmatpush1.msra.mxu0 0.0
    %655 = vmatprep.subr.mxu0 0.0
    %656 = vmatpush1.msra.mxu0 0.0
    %657 = vmatprep.subr.mxu0 0.0
    %658 = vmatpush1.msra.mxu0 0.0
    %659 = vmatprep.subr.mxu0 0.0
    %660 = vmatpush1.msra.mxu0 0.0
    %661 = vmatprep.subr.mxu0 0.0
    %662 = vmatpush1.msra.mxu0 0.0
    %663 = vmatprep.subr.mxu0 0.0
    %664 = vmatpush1.msra.mxu0 0.0
    %665 = vmatprep.subr.mxu0 0.0
    %666 = vmatpush1.msra.mxu0 0.0
    %667 = vmatprep.subr.mxu0 0.0
    %668 = vmatpush1.msra.mxu0 0.0
    %669 = vmatprep.subr.mxu0 0.0
    %670 = vmatpush1.msra.mxu0 0.0
    %671 = vmatprep.subr.mxu0 0.0
    %672 = vmatpush1.msra.mxu0 0.0
    %673 = vmatprep.subr.mxu0 0.0
    %674 = vmatpush1.msra.mxu0 0.0
    %675 = vmatprep.subr.mxu0 0.0
    %676 = vmatpush1.msra.mxu0 0.0
    %677 = vmatprep.subr.mxu0 0.0
    %678 = vmatpush1.msra.mxu0 0.0
    %679 = vmatprep.subr.mxu0 0.0
    %680 = vmatpush1.msra.mxu0 0.0
    %681 = vmatprep.subr.mxu0 0.0
    %682 = vmatpush1.msra.mxu0 0.0
    %683 = vmatprep.subr.mxu0 0.0
    %684 = vmatpush1.msra.mxu0 0.0
    %685 = vmatprep.subr.mxu0 0.0
    %686 = vmatpush1.msra.mxu0 0.0
    %687 = vmatprep.subr.mxu0 0.0
    %688 = vmatpush1.msra.mxu0 0.0
    %689 = vmatprep.subr.mxu0 0.0
    %690 = vmatpush1.msra.mxu0 0.0
    %691 = vmatprep.subr.mxu0 0.0
    %692 = vmatpush1.msra.mxu0 0.0
    %693 = vmatprep.subr.mxu0 0.0
    %694 = vmatpush1.msra.mxu0 0.0
    %695 = vmatprep.subr.mxu0 0.0
    %696 = vmatpush1.msra.mxu0 0.0
    %697 = vmatprep.subr.mxu0 0.0
    %698 = vmatpush1.msra.mxu0 0.0
    %699 = vmatprep.subr.mxu0 0.0
    %700 = vmatpush1.msra.mxu0 0.0
    %701 = vmatprep.subr.mxu0 0.0
    %702 = vmatpush1.msra.mxu0 0.0
    %703 = vmatprep.subr.mxu0 0.0
    %704 = vmatpush1.msra.mxu0 0.0
    %705 = vmatprep.subr.mxu0 0.0
    %706 = vmatpush1.msra.mxu0 0.0
    %707 = vmatprep.subr.mxu0 0.0
    %708 = vmatpush1.msra.mxu0 0.0
    %709 = vmatprep.mubr.f32.mxu0 0.0
    %710 = vmatmul.mubr.f32.gmra.mrb[0].mxu0 %v643
    %v711 = vpop.f32.mrb[0].mxu0
    %v712 = vadd.f32 0.0, %v711
    %v713 = vpop.f32.mrb[0].mxu0
    %714 = vdwg.mxu0
    %v715 = vld [vmem:[%s3] sm:$0xff]
    %v716 = vld [vmem:[%s3 + $0x8] sm:$0xff]
    %vm717 = vcmask 15360
    %v719 = vsel %vm717, %v715, 0
    %v722 = vsel %vm717, %v716, 0
    %vm724 = vcmask 1041408
    %v726 = vsel %vm724, %v712, 0
    %728 = vmatprep.subr.mxu0 0.0
    %729 = vmatpush1.msra.mxu0 %v726
    %730 = vmatprep.subr.mxu0 0.0
    %731 = vmatpush1.msra.mxu0 0.0
    %732 = vmatprep.subr.mxu0 0.0
    %733 = vmatpush1.msra.mxu0 0.0
    %734 = vmatprep.subr.mxu0 0.0
    %735 = vmatpush1.msra.mxu0 0.0
    %736 = vmatprep.subr.mxu0 0.0
    %737 = vmatpush1.msra.mxu0 0.0
    %738 = vmatprep.subr.mxu0 0.0
    %739 = vmatpush1.msra.mxu0 0.0
    %740 = vmatprep.subr.mxu0 0.0
    %741 = vmatpush1.msra.mxu0 0.0
    %742 = vmatprep.subr.mxu0 0.0
    %743 = vmatpush1.msra.mxu0 0.0
    %744 = vmatprep.subr.mxu0 0.0
    %745 = vmatpush1.msra.mxu0 0.0
    %746 = vmatprep.subr.mxu0 0.0
    %747 = vmatpush1.msra.mxu0 0.0
    %748 = vmatprep.subr.mxu0 0.0
    %749 = vmatpush1.msra.mxu0 0.0
    %750 = vmatprep.subr.mxu0 0.0
    %751 = vmatpush1.msra.mxu0 0.0
    %752 = vmatprep.subr.mxu0 0.0
    %753 = vmatpush1.msra.mxu0 0.0
    %754 = vmatprep.subr.mxu0 0.0
    %755 = vmatpush1.msra.mxu0 0.0
    %756 = vmatprep.subr.mxu0 0.0
    %757 = vmatpush1.msra.mxu0 0.0
    %758 = vmatprep.subr.mxu0 0.0
    %759 = vmatpush1.msra.mxu0 0.0
    %760 = vmatprep.subr.mxu0 0.0
    %761 = vmatpush1.msra.mxu0 0.0
    %762 = vmatprep.subr.mxu0 0.0
    %763 = vmatpush1.msra.mxu0 0.0
    %764 = vmatprep.subr.mxu0 0.0
    %765 = vmatpush1.msra.mxu0 0.0
    %766 = vmatprep.subr.mxu0 0.0
    %767 = vmatpush1.msra.mxu0 0.0
    %768 = vmatprep.subr.mxu0 0.0
    %769 = vmatpush1.msra.mxu0 0.0
    %770 = vmatprep.subr.mxu0 0.0
    %771 = vmatpush1.msra.mxu0 0.0
    %772 = vmatprep.subr.mxu0 0.0
    %773 = vmatpush1.msra.mxu0 0.0
    %774 = vmatprep.subr.mxu0 0.0
    %775 = vmatpush1.msra.mxu0 0.0
    %776 = vmatprep.subr.mxu0 0.0
    %777 = vmatpush1.msra.mxu0 0.0
    %778 = vmatprep.subr.mxu0 0.0
    %779 = vmatpush1.msra.mxu0 0.0
    %780 = vmatprep.subr.mxu0 0.0
    %781 = vmatpush1.msra.mxu0 0.0
    %782 = vmatprep.subr.mxu0 0.0
    %783 = vmatpush1.msra.mxu0 0.0
    %784 = vmatprep.subr.mxu0 0.0
    %785 = vmatpush1.msra.mxu0 0.0
    %786 = vmatprep.subr.mxu0 0.0
    %787 = vmatpush1.msra.mxu0 0.0
    %788 = vmatprep.subr.mxu0 0.0
    %789 = vmatpush1.msra.mxu0 0.0
    %790 = vmatprep.subr.mxu0 0.0
    %791 = vmatpush1.msra.mxu0 0.0
    %792 = vmatprep.mubr.f32.mxu0 0.0
    %793 = vmatmul.mubr.f32.gmra.mrb[0].mxu0 %v719
    %v794 = vpop.f32.mrb[0].mxu0
    %v795 = vadd.f32 0.0, %v794
    %v796 = vpop.f32.mrb[0].mxu0
    %797 = vmatprep.mubr.f32.mxu0 0.0
    %798 = vmatmul.mubr.f32.gmra.mrb[0].mxu0 %v722
    %v799 = vpop.f32.mrb[0].mxu0
    %v800 = vadd.f32 0.0, %v799
    %v801 = vpop.f32.mrb[0].mxu0
    %802 = vdwg.mxu0
    %v804 = vsel %vm241, %v795, 0
    %v807 = vsel %vm241, %v800, 0
    %809 = vmatprep.subr.mxu0 0.0
    %810 = vmatpush1.msra.mxu0 %v45
    %811 = vmatprep.subr.mxu0 0.0
    %812 = vmatpush1.msra.mxu0 %v46
    %813 = vmatprep.subr.mxu0 0.0
    %814 = vmatpush1.msra.mxu0 %v47
    %815 = vmatprep.subr.mxu0 0.0
    %816 = vmatpush1.msra.mxu0 %v48
    %817 = vmatprep.subr.mxu0 0.0
    %818 = vmatpush1.msra.mxu0 0.0
    %819 = vmatprep.subr.mxu0 0.0
    %820 = vmatpush1.msra.mxu0 0.0
    %821 = vmatprep.subr.mxu0 0.0
    %822 = vmatpush1.msra.mxu0 0.0
    %823 = vmatprep.subr.mxu0 0.0
    %824 = vmatpush1.msra.mxu0 0.0
    %825 = vmatprep.subr.mxu0 0.0
    %826 = vmatpush1.msra.mxu0 0.0
    %827 = vmatprep.subr.mxu0 0.0
    %828 = vmatpush1.msra.mxu0 0.0
    %829 = vmatprep.subr.mxu0 0.0
    %830 = vmatpush1.msra.mxu0 0.0
    %831 = vmatprep.subr.mxu0 0.0
    %832 = vmatpush1.msra.mxu0 0.0
    %833 = vmatprep.subr.mxu0 0.0
    %834 = vmatpush1.msra.mxu0 0.0
    %835 = vmatprep.subr.mxu0 0.0
    %836 = vmatpush1.msra.mxu0 0.0
    %837 = vmatprep.subr.mxu0 0.0
    %838 = vmatpush1.msra.mxu0 0.0
    %839 = vmatprep.subr.mxu0 0.0
    %840 = vmatpush1.msra.mxu0 0.0
    %841 = vmatprep.subr.mxu0 0.0
    %842 = vmatpush1.msra.mxu0 0.0
    %843 = vmatprep.subr.mxu0 0.0
    %844 = vmatpush1.msra.mxu0 0.0
    %845 = vmatprep.subr.mxu0 0.0
    %846 = vmatpush1.msra.mxu0 0.0
    %847 = vmatprep.subr.mxu0 0.0
    %848 = vmatpush1.msra.mxu0 0.0
    %849 = vmatprep.subr.mxu0 0.0
    %850 = vmatpush1.msra.mxu0 0.0
    %851 = vmatprep.subr.mxu0 0.0
    %852 = vmatpush1.msra.mxu0 0.0
    %853 = vmatprep.subr.mxu0 0.0
    %854 = vmatpush1.msra.mxu0 0.0
    %855 = vmatprep.subr.mxu0 0.0
    %856 = vmatpush1.msra.mxu0 0.0
    %857 = vmatprep.subr.mxu0 0.0
    %858 = vmatpush1.msra.mxu0 0.0
    %859 = vmatprep.subr.mxu0 0.0
    %860 = vmatpush1.msra.mxu0 0.0
    %861 = vmatprep.subr.mxu0 0.0
    %862 = vmatpush1.msra.mxu0 0.0
    %863 = vmatprep.subr.mxu0 0.0
    %864 = vmatpush1.msra.mxu0 0.0
    %865 = vmatprep.subr.mxu0 0.0
    %866 = vmatpush1.msra.mxu0 0.0
    %867 = vmatprep.subr.mxu0 0.0
    %868 = vmatpush1.msra.mxu0 0.0
    %869 = vmatprep.subr.mxu0 0.0
    %870 = vmatpush1.msra.mxu0 0.0
    %871 = vmatprep.subr.mxu0 0.0
    %872 = vmatpush1.msra.mxu0 0.0
    %873 = vmatprep.mubr.f32.mxu0 0.0
    %874 = vmatmul.mubr.f32.gmra.mrb[0].mxu0 %v804
    %v875 = vpop.f32.mrb[0].mxu0
    %v876 = vadd.f32 0.0, %v875
    %v877 = vpop.f32.mrb[0].mxu0
    %878 = vmatprep.mubr.f32.mxu0 0.0
    %879 = vmatmul.mubr.f32.gmra.mrb[0].mxu0 %v807
    %v880 = vpop.f32.mrb[0].mxu0
    %v881 = vadd.f32 0.0, %v880
    %v882 = vpop.f32.mrb[0].mxu0
    %883 = vdwg.mxu0
    %v885 = vsel %vm241, %v639, 0
    %v888 = vsel %vm241, %v640, 0
    %890 = vmatprep.subr.mxu0 0.0
    %891 = vmatpush1.msra.mxu0 %v41
    %892 = vmatprep.subr.mxu0 0.0
    %893 = vmatpush1.msra.mxu0 %v42
    %894 = vmatprep.subr.mxu0 0.0
    %895 = vmatpush1.msra.mxu0 %v43
    %896 = vmatprep.subr.mxu0 0.0
    %897 = vmatpush1.msra.mxu0 %v44
    %898 = vmatprep.subr.mxu0 0.0
    %899 = vmatpush1.msra.mxu0 0.0
    %900 = vmatprep.subr.mxu0 0.0
    %901 = vmatpush1.msra.mxu0 0.0
    %902 = vmatprep.subr.mxu0 0.0
    %903 = vmatpush1.msra.mxu0 0.0
    %904 = vmatprep.subr.mxu0 0.0
    %905 = vmatpush1.msra.mxu0 0.0
    %906 = vmatprep.subr.mxu0 0.0
    %907 = vmatpush1.msra.mxu0 0.0
    %908 = vmatprep.subr.mxu0 0.0
    %909 = vmatpush1.msra.mxu0 0.0
    %910 = vmatprep.subr.mxu0 0.0
    %911 = vmatpush1.msra.mxu0 0.0
    %912 = vmatprep.subr.mxu0 0.0
    %913 = vmatpush1.msra.mxu0 0.0
    %914 = vmatprep.subr.mxu0 0.0
    %915 = vmatpush1.msra.mxu0 0.0
    %916 = vmatprep.subr.mxu0 0.0
    %917 = vmatpush1.msra.mxu0 0.0
    %918 = vmatprep.subr.mxu0 0.0
    %919 = vmatpush1.msra.mxu0 0.0
    %920 = vmatprep.subr.mxu0 0.0
    %921 = vmatpush1.msra.mxu0 0.0
    %922 = vmatprep.subr.mxu0 0.0
    %923 = vmatpush1.msra.mxu0 0.0
    %924 = vmatprep.subr.mxu0 0.0
    %925 = vmatpush1.msra.mxu0 0.0
    %926 = vmatprep.subr.mxu0 0.0
    %927 = vmatpush1.msra.mxu0 0.0
    %928 = vmatprep.subr.mxu0 0.0
    %929 = vmatpush1.msra.mxu0 0.0
    %930 = vmatprep.subr.mxu0 0.0
    %931 = vmatpush1.msra.mxu0 0.0
    %932 = vmatprep.subr.mxu0 0.0
    %933 = vmatpush1.msra.mxu0 0.0
    %934 = vmatprep.subr.mxu0 0.0
    %935 = vmatpush1.msra.mxu0 0.0
    %936 = vmatprep.subr.mxu0 0.0
    %937 = vmatpush1.msra.mxu0 0.0
    %938 = vmatprep.subr.mxu0 0.0
    %939 = vmatpush1.msra.mxu0 0.0
    %940 = vmatprep.subr.mxu0 0.0
    %941 = vmatpush1.msra.mxu0 0.0
    %942 = vmatprep.subr.mxu0 0.0
    %943 = vmatpush1.msra.mxu0 0.0
    %944 = vmatprep.subr.mxu0 0.0
    %945 = vmatpush1.msra.mxu0 0.0
    %946 = vmatprep.subr.mxu0 0.0
    %947 = vmatpush1.msra.mxu0 0.0
    %948 = vmatprep.subr.mxu0 0.0
    %949 = vmatpush1.msra.mxu0 0.0
    %950 = vmatprep.subr.mxu0 0.0
    %951 = vmatpush1.msra.mxu0 0.0
    %952 = vmatprep.subr.mxu0 0.0
    %953 = vmatpush1.msra.mxu0 0.0
    %954 = vmatprep.mubr.f32.mxu0 0.0
    %955 = vmatmul.mubr.f32.gmra.mrb[0].mxu0 %v885
    %v956 = vpop.f32.mrb[0].mxu0
    %v957 = vadd.f32 %v876, %v956
    %v958 = vpop.f32.mrb[0].mxu0
    %959 = vmatprep.mubr.f32.mxu0 0.0
    %960 = vmatmul.mubr.f32.gmra.mrb[0].mxu0 %v888
    %v961 = vpop.f32.mrb[0].mxu0
    %v962 = vadd.f32 %v881, %v961
    %v963 = vpop.f32.mrb[0].mxu0
    %964 = vdwg.mxu0
    %v965 = vlaneseq
    %v966 = vshrl.u32 %v965, 7
    %v967 = vsub.s32 0, %v966
    %v968 = vrot.slane %v49, %v967
    %v969 = vadd.f32 %v957, %v968
    %v970 = vadd.f32 %v962, %v968
    %v971 = vsel %vm241, %v969, 0.0
    %v972 = vsel %vm241, %v970, 0.0
    %v973 = vadd.f32 %v971, %v972
    %v974 = vrot.slane %v973, 4
    %v975 = vadd.f32 %v973, %v974
    %v976 = vrot.slane %v975, 2
    %v977 = vadd.f32 %v975, %v976
    %v978 = vrot.slane %v977, 1
    %v979 = vadd.f32 %v977, %v978
    %v980 = vmul.f32 %v979, 0.0625
    %v981 = vmul.f32 %v969, %v969
    %v982 = vmul.f32 %v970, %v970
    %v983 = vsel %vm241, %v981, 0.0
    %v984 = vsel %vm241, %v982, 0.0
    %v985 = vadd.f32 %v983, %v984
    %v986 = vrot.slane %v985, 4
    %v987 = vadd.f32 %v985, %v986
    %v988 = vrot.slane %v987, 2
    %v989 = vadd.f32 %v987, %v988
    %v990 = vrot.slane %v989, 1
    %v991 = vadd.f32 %v989, %v990
    %v992 = vmul.f32 %v991, 0.0625
    %v993 = vmul.f32 %v980, %v980
    %v994 = vsub.f32 %v992, %v993
    %v995 = vmax.f32 %v994, 0.0
    %v996 = vadd.f32 %v995, 1e-05
    %v997 = vrsqrt.pop %v996
    %v998 = vmul.f32 %v997, %v50
    %v999 = vsub.f32 %v969, %v980
    %v1000 = vsub.f32 %v970, %v980
    %v1001 = vlaneseq
    %v1002 = vshrl.u32 %v1001, 7
    %v1003 = vsub.s32 0, %v1002
    %v1004 = vrot.slane %v998, %v1003
    %v1005 = vmul.f32 %v999, %v1004
    %v1006 = vmul.f32 %v1000, %v1004
    %v1007 = vlaneseq
    %v1008 = vshrl.u32 %v1007, 7
    %v1009 = vsub.s32 0, %v1008
    %v1010 = vrot.slane %v51, %v1009
    %v1011 = vadd.f32 %v1005, %v1010
    %v1012 = vadd.f32 %v1006, %v1010
    %v1013 = vmax.f32 %v1011, 0.0
    %v1014 = vmax.f32 %v1012, 0.0
    %v1015 = vlaneseq
    %v1016 = vshrl.u32 %v1015, 7
    %v1017 = vsub.s32 0, %v1016
    %v1018 = vrot.slane %v56, %v1017
    %v1020 = vsel %vm241, %v1013, 0
    %v1023 = vsel %vm241, %v1014, 0
    %1025 = vmatprep.subr.mxu0 0.0
    %1026 = vmatpush1.msra.mxu0 %v52
    %1027 = vmatprep.subr.mxu0 0.0
    %1028 = vmatpush1.msra.mxu0 %v53
    %1029 = vmatprep.subr.mxu0 0.0
    %1030 = vmatpush1.msra.mxu0 %v54
    %1031 = vmatprep.subr.mxu0 0.0
    %1032 = vmatpush1.msra.mxu0 %v55
    %1033 = vmatprep.subr.mxu0 0.0
    %1034 = vmatpush1.msra.mxu0 0.0
    %1035 = vmatprep.subr.mxu0 0.0
    %1036 = vmatpush1.msra.mxu0 0.0
    %1037 = vmatprep.subr.mxu0 0.0
    %1038 = vmatpush1.msra.mxu0 0.0
    %1039 = vmatprep.subr.mxu0 0.0
    %1040 = vmatpush1.msra.mxu0 0.0
    %1041 = vmatprep.subr.mxu0 0.0
    %1042 = vmatpush1.msra.mxu0 0.0
    %1043 = vmatprep.subr.mxu0 0.0
    %1044 = vmatpush1.msra.mxu0 0.0
    %1045 = vmatprep.subr.mxu0 0.0
    %1046 = vmatpush1.msra.mxu0 0.0
    %1047 = vmatprep.subr.mxu0 0.0
    %1048 = vmatpush1.msra.mxu0 0.0
    %1049 = vmatprep.subr.mxu0 0.0
    %1050 = vmatpush1.msra.mxu0 0.0
    %1051 = vmatprep.subr.mxu0 0.0
    %1052 = vmatpush1.msra.mxu0 0.0
    %1053 = vmatprep.subr.mxu0 0.0
    %1054 = vmatpush1.msra.mxu0 0.0
    %1055 = vmatprep.subr.mxu0 0.0
    %1056 = vmatpush1.msra.mxu0 0.0
    %1057 = vmatprep.subr.mxu0 0.0
    %1058 = vmatpush1.msra.mxu0 0.0
    %1059 = vmatprep.subr.mxu0 0.0
    %1060 = vmatpush1.msra.mxu0 0.0
    %1061 = vmatprep.subr.mxu0 0.0
    %1062 = vmatpush1.msra.mxu0 0.0
    %1063 = vmatprep.subr.mxu0 0.0
    %1064 = vmatpush1.msra.mxu0 0.0
    %1065 = vmatprep.subr.mxu0 0.0
    %1066 = vmatpush1.msra.mxu0 0.0
    %1067 = vmatprep.subr.mxu0 0.0
    %1068 = vmatpush1.msra.mxu0 0.0
    %1069 = vmatprep.subr.mxu0 0.0
    %1070 = vmatpush1.msra.mxu0 0.0
    %1071 = vmatprep.subr.mxu0 0.0
    %1072 = vmatpush1.msra.mxu0 0.0
    %1073 = vmatprep.subr.mxu0 0.0
    %1074 = vmatpush1.msra.mxu0 0.0
    %1075 = vmatprep.subr.mxu0 0.0
    %1076 = vmatpush1.msra.mxu0 0.0
    %1077 = vmatprep.subr.mxu0 0.0
    %1078 = vmatpush1.msra.mxu0 0.0
    %1079 = vmatprep.subr.mxu0 0.0
    %1080 = vmatpush1.msra.mxu0 0.0
    %1081 = vmatprep.subr.mxu0 0.0
    %1082 = vmatpush1.msra.mxu0 0.0
    %1083 = vmatprep.subr.mxu0 0.0
    %1084 = vmatpush1.msra.mxu0 0.0
    %1085 = vmatprep.subr.mxu0 0.0
    %1086 = vmatpush1.msra.mxu0 0.0
    %1087 = vmatprep.subr.mxu0 0.0
    %1088 = vmatpush1.msra.mxu0 0.0
    %1089 = vmatprep.mubr.f32.mxu0 0.0
    %1090 = vmatmul.mubr.f32.gmra.mrb[0].mxu0 %v1020
    %v1091 = vpop.f32.mrb[0].mxu0
    %v1092 = vadd.f32 %v1018, %v1091
    %v1093 = vpop.f32.mrb[0].mxu0
    %1094 = vmatprep.mubr.f32.mxu0 0.0
    %1095 = vmatmul.mubr.f32.gmra.mrb[0].mxu0 %v1023
    %v1096 = vpop.f32.mrb[0].mxu0
    %v1097 = vadd.f32 %v1018, %v1096
    %v1098 = vpop.f32.mrb[0].mxu0
    %1099 = vdwg.mxu0
    %1100 = vst [vmem:[%s5] sm:$0xff] %v1092
    %1101 = vst [vmem:[%s5 + $0x8] sm:$0xff] %v1097
    // Predicated region
    $region26: #{run_fused.1} parent=1 // pred_check
      _
    $region27: #{run_fused.1} parent=1 // pred_check_branch
      %1103 = sbr.rel (0) target = $region29
    $region28: #{run_fused.1} parent=1 // pred_region
      _
    $region29: #{run_fused.1} parent=1 // pred_fallthru
      _
    // Predicated region
    $region30: #{run_fused.1} parent=1 // pred_check
      _
    $region31: #{run_fused.1} parent=1 // pred_check_branch
      %1105 = sbr.rel (0) target = $region33
    $region32: #{run_fused.1} parent=1 // pred_region
      _
    $region33: #{run_fused.1} parent=1 // pred_fallthru
      _
    %1106 = vsyncpa [#allocation3], 1

</llo_original>
